<compile_context>
chip_gen: v7x
topology: tpu7x:2x2x1
jax: 0.10.0
libtpu: 0.0.40
codegen_flags: <defaults>
</compile_context>

<pallas_src>
import functools

import jax
import jax.numpy as jnp
from jax import lax
from jax.experimental import pallas as pl
from jax.experimental.pallas import tpu as pltpu

_LANE = 128
_TARGET_BLOCK_ELEMS = 512 * 1024  # ~2 MiB of f32 per block


def _dge_kernel(x_ref, o_ref, acc_ref, *, tm, w, rows):
    p = pl.program_id(0)  # 0 = positive-min reduction sweep, 1 = normalize sweep
    i = pl.program_id(1)  # row-tile index

    @pl.when((p == 0) & (i == 0))
    def _init():
        acc_ref[...] = jnp.full_like(acc_ref, jnp.inf)

    @pl.when(p == 0)
    def _reduce():
        xb = x_ref[...].astype(jnp.float32)
        # Mask rows of a partial last tile: data past `rows` is whatever the
        # clamped DMA left in VMEM and must not enter the min.
        row_ids = lax.broadcasted_iota(jnp.int32, (tm, w), 0)
        valid = (i * tm + row_ids) < rows
        masked = jnp.where((xb > 0) & valid, xb, jnp.inf)
        blk_min = jnp.min(masked, axis=0, keepdims=True)   # (1, w)
        blk_min = jnp.min(blk_min, axis=1, keepdims=True)  # (1, 1)
        acc_ref[...] = jnp.minimum(acc_ref[...], blk_min)

    @pl.when(p == 1)
    def _normalize():
        xb = x_ref[...].astype(jnp.float32)
        m = acc_ref[...]        # (1, 1) global positive min, resident in VMEM
        inv = 1.0 / m           # single exact reciprocal, hoisted off the vector path
        y = jnp.minimum(jnp.maximum(xb, 0.0), m) * inv
        o_ref[...] = y.astype(o_ref.dtype)


def differentiable_greater_equal(x):
    """out = (clamp(relu(x), max=min(x[x>0])) / min(x[x>0]))[..., None]"""
    orig_shape = x.shape
    n = x.size

    # Lane-dense 2-D view: pick the widest lane dim dividing n so the reshape
    # is a free view (no pad, no copy) on the common path.
    w = next((c for c in (1024, 512, 256, 128) if n % c == 0), None)
    padded = w is None
    if padded:
        # TODO(synk): handle odd element counts fully in-kernel; this fallback
        # pays one pad copy but stays correct (pad zeros are never positive).
        w = _LANE
        pad = (-n) % w
        x2 = jnp.pad(x.reshape(-1), (0, pad)).reshape(-1, w)
    else:
        x2 = x.reshape(-1, w)

    rows = x2.shape[0]
    target_rows = max(8, (_TARGET_BLOCK_ELEMS // w) // 8 * 8)
    tm = rows if rows <= target_rows else target_rows  # full dim or multiple of 8
    num_tiles = pl.cdiv(rows, tm)

    kernel = functools.partial(_dge_kernel, tm=tm, w=w, rows=rows)

    y2 = pl.pallas_call(
        kernel,
        out_shape=jax.ShapeDtypeStruct((rows, w), x.dtype),
        grid_spec=pltpu.PrefetchScalarGridSpec(
            num_scalar_prefetch=0,
            grid=(2, num_tiles),
            in_specs=[pl.BlockSpec((tm, w), lambda p, i: (i, 0))],
            # Freeze the output block at 0 during phase 0 (no HBM writeback),
            # then walk the tiles during phase 1.
            out_specs=pl.BlockSpec((tm, w), lambda p, i: (p * i, 0)),
            scratch_shapes=[pltpu.VMEM((1, 1), jnp.float32)],
        ),
        compiler_params=pltpu.CompilerParams(
            dimension_semantics=("arbitrary", "arbitrary")),
    )(x2)

    if padded:
        y = y2.reshape(-1)[:n].reshape(orig_shape + (1,))
    else:
        y = y2.reshape(orig_shape + (1,))
    return y


def _reference(x):
    xf = x.astype(jnp.float32)
    m = jnp.min(jnp.where(xf > 0, xf, jnp.inf))
    return (jnp.minimum(jnp.maximum(xf, 0.0), m) / m)[..., None].astype(x.dtype)


if __name__ == "__main__":
    key = jax.random.PRNGKey(0)
    x = jax.random.normal(key, (2, 4, 16, 16), dtype=jnp.float32)

    out = differentiable_greater_equal(x)
    out = jax.block_until_ready(out)

    ref = _reference(x)
    assert out.shape == (2, 4, 16, 16, 1), out.shape
    assert jnp.allclose(out, ref, atol=1e-6, rtol=1e-5), float(
        jnp.max(jnp.abs(out - ref)))
    print("KERNEL_OK")
</pallas_src>

<mosaic_0001>
module attributes {stable_mosaic.version = 11 : i64} {
  func.func @_dge_kernel(%arg0: i32, %arg1: i32, %arg2: memref<2x1024xf32, #tpu.memory_space<vmem>>, %arg3: memref<2x1024xf32, #tpu.memory_space<vmem>>, %arg4: memref<1x1xf32, #tpu.memory_space<vmem>>) attributes {dimension_semantics = [#tpu.dimension_semantics<arbitrary>, #tpu.dimension_semantics<arbitrary>], iteration_bounds = array<i64: 2, 1>, scalar_prefetch = 0 : i64, scratch_operands = 1 : i64, tpu.core_type = #tpu.core_type<tc>, window_params = [{transform_indices = @transform_0, window_bounds = array<i64: 2, 1024>}, {transform_indices = @transform_1, window_bounds = array<i64: 2, 1024>}]} {
    %c0_i32 = arith.constant 0 : i32
    %0 = arith.cmpi eq, %arg0, %c0_i32 : i32
    %c0_i32_0 = arith.constant 0 : i32
    %1 = arith.cmpi eq, %arg1, %c0_i32_0 : i32
    %2 = arith.andi %0, %1 : i1
    %3 = arith.extui %2 : i1 to i32
    %c0_i32_1 = arith.constant 0 : i32
    %4 = arith.cmpi ne, %3, %c0_i32_1 : i32
    scf.if %4 {
      %cst = arith.constant 0x7F800000 : f32
      %11 = vector.broadcast %cst : f32 to vector<1x1xf32>
      %c0 = arith.constant 0 : index
      %c0_5 = arith.constant 0 : index
      %12 = vector.load %arg4[%c0, %c0_5] : memref<1x1xf32, #tpu.memory_space<vmem>>, vector<1x1xf32>
      tpu.vector_store %arg4[%c0, %c0_5], %11 {strides = array<i32>} : memref<1x1xf32, #tpu.memory_space<vmem>>, vector<1x1xf32>,
    } else {
    }
    %c0_i32_2 = arith.constant 0 : i32
    %5 = arith.cmpi eq, %arg0, %c0_i32_2 : i32
    %6 = arith.extui %5 : i1 to i32
    %c0_i32_3 = arith.constant 0 : i32
    %7 = arith.cmpi ne, %6, %c0_i32_3 : i32
    scf.if %7 {
      %c0 = arith.constant 0 : index
      %c0_5 = arith.constant 0 : index
      %11 = vector.load %arg2[%c0, %c0_5] : memref<2x1024xf32, #tpu.memory_space<vmem>>, vector<2x1024xf32>
      %12 = tpu.iota {dimensions = array<i32: 0>} : vector<2x1024xi32>
      %c2_i32 = arith.constant 2 : i32
      %13 = arith.muli %arg1, %c2_i32 : i32
      %14 = vector.broadcast %13 : i32 to vector<2x1024xi32>
      %15 = arith.addi %14, %12 : vector<2x1024xi32>
      %c2_i32_6 = arith.constant 2 : i32
      %16 = vector.broadcast %c2_i32_6 : i32 to vector<2x1024xi32>
      %17 = arith.cmpi slt, %15, %16 : vector<2x1024xi32>
      %cst = arith.constant 0.000000e+00 : f32
      %18 = vector.broadcast %cst : f32 to vector<2x1024xf32>
      %19 = arith.cmpf ogt, %11, %18 : vector<2x1024xf32>
      %20 = arith.andi %19, %17 : vector<2x1024xi1>
      %cst_7 = arith.constant 0x7F800000 : f32
      %21 = vector.broadcast %cst_7 : f32 to vector<2x1024xf32>
      %22 = arith.select %20, %11, %21 : vector<2x1024xi1>, vector<2x1024xf32>
      %cst_8 = arith.constant dense<0x7F800000> : vector<1024xf32>
      %23 = vector.multi_reduction <minimumf>, %22, %cst_8 [0] : vector<2x1024xf32> to vector<1024xf32>
      %24 = vector.shape_cast %23 : vector<1024xf32> to vector<1x1024xf32>
      %cst_9 = arith.constant dense<0x7F800000> : vector<1xf32>
      %25 = vector.multi_reduction <minimumf>, %24, %cst_9 [1] : vector<1x1024xf32> to vector<1xf32>
      %26 = vector.shape_cast %25 : vector<1xf32> to vector<1x1xf32>
      %c0_10 = arith.constant 0 : index
      %c0_11 = arith.constant 0 : index
      %27 = vector.load %arg4[%c0_10, %c0_11] : memref<1x1xf32, #tpu.memory_space<vmem>>, vector<1x1xf32>
      %28 = arith.minimumf %27, %26 : vector<1x1xf32>
      %c0_12 = arith.constant 0 : index
      %c0_13 = arith.constant 0 : index
      %29 = vector.load %arg4[%c0_12, %c0_13] : memref<1x1xf32, #tpu.memory_space<vmem>>, vector<1x1xf32>
      tpu.vector_store %arg4[%c0_12, %c0_13], %28 {strides = array<i32>} : memref<1x1xf32, #tpu.memory_space<vmem>>, vector<1x1xf32>,
    } else {
    }
    %c1_i32 = arith.constant 1 : i32
    %8 = arith.cmpi eq, %arg0, %c1_i32 : i32
    %9 = arith.extui %8 : i1 to i32
    %c0_i32_4 = arith.constant 0 : i32
    %10 = arith.cmpi ne, %9, %c0_i32_4 : i32
    scf.if %10 {
      %c0 = arith.constant 0 : index
      %c0_5 = arith.constant 0 : index
      %11 = vector.load %arg2[%c0, %c0_5] : memref<2x1024xf32, #tpu.memory_space<vmem>>, vector<2x1024xf32>
      %c0_6 = arith.constant 0 : index
      %c0_7 = arith.constant 0 : index
      %12 = vector.load %arg4[%c0_6, %c0_7] : memref<1x1xf32, #tpu.memory_space<vmem>>, vector<1x1xf32>
      %cst = arith.constant 1.000000e+00 : f32
      %13 = vector.broadcast %cst : f32 to vector<1x1xf32>
      %14 = arith.divf %13, %12 : vector<1x1xf32>
      %cst_8 = arith.constant 0.000000e+00 : f32
      %15 = vector.broadcast %cst_8 : f32 to vector<2x1024xf32>
      %16 = arith.maximumf %11, %15 : vector<2x1024xf32>
      %17 = vector.broadcast %12 : vector<1x1xf32> to vector<2x1024xf32>
      %18 = arith.minimumf %16, %17 : vector<2x1024xf32>
      %19 = vector.broadcast %14 : vector<1x1xf32> to vector<2x1024xf32>
      %20 = arith.mulf %18, %19 : vector<2x1024xf32>
      %c0_9 = arith.constant 0 : index
      %c0_10 = arith.constant 0 : index
      %21 = vector.load %arg3[%c0_9, %c0_10] : memref<2x1024xf32, #tpu.memory_space<vmem>>, vector<2x1024xf32>
      tpu.vector_store %arg3[%c0_9, %c0_10], %20 {strides = array<i32>} : memref<2x1024xf32, #tpu.memory_space<vmem>>, vector<2x1024xf32>,
    } else {
    }
    return
  }
  func.func @transform_0(%arg0: i32, %arg1: i32) -> (i32, i32) {
    %c0_i32 = arith.constant 0 : i32
    %c0_i32_0 = arith.constant 0 : i32
    return %arg1, %c0_i32 : i32, i32
  }
  func.func @transform_1(%arg0: i32, %arg1: i32) -> (i32, i32) {
    %0 = arith.muli %arg0, %arg1 : i32
    %c0_i32 = arith.constant 0 : i32
    %c0_i32_0 = arith.constant 0 : i32
    return %0, %c0_i32 : i32, i32
  }
}

</mosaic_0001>

<llo_original>
// kernel: tpu_custom_call.1
$region0: #{tpu_custom_call.1}
  #allocation0 [shape = 'u32[]', space=smem, size = 0x4, offset = 0x4, fixed_abs, tag = 'smem constant byte address 0x4 - core index']
  #allocation1 [shape = 'u32[144,128]{1,0:T(1,128)}', space=vmem, size = 0x12000, scoped, tag = 'internal scratch']
  #allocation2 [shape = 'f32[1,1]{1,0:T(1,128)}', space=vmem, size = 0x200, scoped, tag = 'scratch operand']
  %s0 = inlined_call_operand.hbm [shape: f32[2,1024], index: 0, kind: input, shape index: {}]
  %s1 = inlined_call_operand.hbm [shape: f32[2,1024], index: 1, kind: output, shape index: {}]
  %s2 = sld [smem:[#allocation0]]
  $region53: #{tpu_custom_call.1} parent=0
    _
  %s4 = ssub.s32 1, %s2
  %s5 = scalar_select 0, %s4, %s2
  $region1: #{tpu_custom_call.1} parent=0
    #allocation3 [shape = 'u8[8192]{0}', space=vmem, size = 0x2000, scoped, tag = 'input window, operand 0, single buffered']
    #allocation4 [shape = 's32[2]{0}', space=sflag, size = 0x8, scoped, tag = 'scoped memory for tpu_custom_call.1']
    #allocation5 [shape = 's32[2]{0}', space=sflag, size = 0x8, scoped, tag = 'scoped memory for tpu_custom_call.1']
    #allocation6 [shape = 'u8[16384]{0}', space=vmem, size = 0x4000, scoped, tag = 'output window, operand 0']
    %6 = vsyncpa [#allocation4], 0
    %7 = vsyncpa [#allocation5], 0
    %s8 = scalar_lea.sflag [#allocation5], 1
    %9 = vsyncpa %s8, 0
    loop: start=0, step=1, limit=4
    $region2: #{tpu_custom_call.1} parent=1 // loop_pre_header
      _
    $region3: #{tpu_custom_call.1} parent=1 // loop_header
      %s11 = sphi 0, %s15
      %p12 = scmp.ge.s32.totalorder %s11, 4
      %s18 = sphi 0, %s30
      %s19 = sphi 0, %s26
      %s20 = sphi 0, %s18
      %s21 = sphi 0, %s19
      %s22 = sphi 0, %s20
      %s23 = sphi 0, %s21
      %s33 = sphi 0, %s35
      %s36 = sphi 0, %s33
      %s37 = sphi 0, %s36
      %s53 = sphi 0, %s37
      %s61 = sphi 0, %s63
      %s64 = sphi 0, %s61
      %s65 = sphi 0, %s64
      %s81 = sphi 0, %s65
    $region4: #{tpu_custom_call.1} parent=1 // loop_header_branch
      %14 = sbr.rel (%p12) target = $region8
    $region5: #{tpu_custom_call.1} parent=1 // loop_body
      %s16 = ssub.s32 %s11, 1
      %s17 = ssub.s32 %s11, 2
      %s24 = sadd.s32 1, %s19
      %p25 = scmp.ge.s32.totalorder %s24, 1
      %s26 = scalar_select %p25, 0, %s24
      %s27 = sadd.s32 1, %s18
      %s28 = scalar_select %p25, %s27, %s18
      %p29 = scmp.ge.s32.totalorder %s28, 2
      %s30 = scalar_select %p29, 0, %s28
      %s31 = ssub.s32 %s19, %s26
      %p32 = scmp.eq.s32.totalorder %s31, 0
      %s34 = sadd.s32 %s33, 1
      %s35 = scalar_select %p32, %s33, %s34
      %p38 = pneg %p32
      %p39 = scmp.eq.s32.totalorder %s11, 1
      %p40 = por %p38, %p39
      %p41 = scmp.ne.s32.totalorder %s33, %s36
      %p42 = scmp.eq.s32.totalorder %s11, 0
      %p43 = por %p41, %p42
      %p44 = scmp.ne.s32.totalorder %s33, %s36
      %p45 = scmp.eq.s32.totalorder %s16, 1
      %p46 = por %p44, %p45
      %p47 = scmp.ne.s32.totalorder %s36, %s37
      %p48 = scmp.eq.s32.totalorder %s16, 0
      %p49 = por %p47, %p48
      %p50 = scmp.ne.s32.totalorder %s36, %s37
      %p51 = scmp.eq.s32.totalorder %s17, 1
      %p52 = por %p50, %p51
      %p54 = scmp.ne.s32.totalorder %s37, %s53
      %p55 = scmp.eq.s32.totalorder %s17, 0
      %p56 = por %p54, %p55
      %s57 = smul.u32 %s18, %s19
      %s58 = smul.u32 %s30, %s26
      %s59 = ssub.s32 %s57, %s58
      %p60 = scmp.eq.s32.totalorder %s59, 0
      %s62 = sadd.s32 %s61, 1
      %s63 = scalar_select %p60, %s61, %s62
      %p66 = pneg %p60
      %p67 = scmp.eq.s32.totalorder %s11, 1
      %p68 = por %p66, %p67
      %p69 = scmp.ne.s32.totalorder %s61, %s64
      %p70 = scmp.eq.s32.totalorder %s11, 0
      %p71 = por %p69, %p70
      %p72 = scmp.ne.s32.totalorder %s61, %s64
      %p73 = scmp.eq.s32.totalorder %s16, 1
      %p74 = por %p72, %p73
      %p75 = scmp.ne.s32.totalorder %s64, %s65
      %p76 = scmp.eq.s32.totalorder %s16, 0
      %p77 = por %p75, %p76
      %p78 = scmp.ne.s32.totalorder %s64, %s65
      %p79 = scmp.eq.s32.totalorder %s17, 1
      %p80 = por %p78, %p79
      %p82 = scmp.ne.s32.totalorder %s65, %s81
      %p83 = scmp.eq.s32.totalorder %s17, 0
      %p84 = por %p82, %p83
      %p85 = scmp.le.s32.totalorder 1, %s11
      %p86 = scmp.lt.s32.totalorder %s11, 3
      %p87 = pnand %p85, %p86
      %p88 = pneg %p87
      // Predicated region
      $region9: #{tpu_custom_call.1} parent=5 // pred_check
        _
      $region10: #{tpu_custom_call.1} parent=5 // pred_check_branch
        %90 = sbr.rel (%p87) target = $region12
      $region11: #{tpu_custom_call.1} parent=5 // pred_region
        %s91 = ssub.s32 %s11, 1
        // Predicated region
        $region13: #{tpu_custom_call.1} parent=11 // pred_check
          %p92 = pneg %p49
        $region14: #{tpu_custom_call.1} parent=11 // pred_check_branch
          %94 = sbr.rel (%p92) target = $region16
        $region15: #{tpu_custom_call.1} parent=11 // pred_region
          %s96 = ssub.s32 256, 256
          %97 = vsyncadd [#allocation4], %s96
          %s98 = smul.addr %s21, 8
          %s99 = smul.addr %s98, 32
          %s100 = scalar_lea.hbm %s0, %s99
          %s102 = sshll.u32 [#allocation3], 4
          %s103 = int_to_ptr.vmem [resolvable:$true] %s102
          %105 = dma.hbm_to_vmem [thread:$0]  %s100, 256, %s103, [#allocation4]
        $region16: #{tpu_custom_call.1} parent=11 // pred_fallthru
          _
      $region12: #{tpu_custom_call.1} parent=5 // pred_fallthru
        _
      %p106 = scmp.lt.s32.totalorder %s11, 2
      // Predicated region
      $region17: #{tpu_custom_call.1} parent=5 // pred_check
        %p107 = pneg %p106
      $region18: #{tpu_custom_call.1} parent=5 // pred_check_branch
        %109 = sbr.rel (%p107) target = $region20
      $region19: #{tpu_custom_call.1} parent=5 // pred_region
        _
      $region20: #{tpu_custom_call.1} parent=5 // pred_fallthru
        _
      %p110 = scmp.le.s32.totalorder 1, %s11
      %p111 = scmp.lt.s32.totalorder %s11, 3
      %p112 = pnand %p110, %p111
      %p113 = pneg %p112
      // Predicated region
      $region21: #{tpu_custom_call.1} parent=5 // pred_check
        _
      $region22: #{tpu_custom_call.1} parent=5 // pred_check_branch
        %115 = sbr.rel (%p112) target = $region24
      $region23: #{tpu_custom_call.1} parent=5 // pred_region
        %s116 = ssub.s32 %s11, 1
        // Predicated region
        $region25: #{tpu_custom_call.1} parent=23 // pred_check
          %p117 = pneg %p49
        $region26: #{tpu_custom_call.1} parent=23 // pred_check_branch
          %119 = sbr.rel (%p117) target = $region28
        $region27: #{tpu_custom_call.1} parent=23 // pred_region
          %120 = dma.done [#allocation4], 256
        $region28: #{tpu_custom_call.1} parent=23 // pred_fallthru
          _
        %p121 = pneg %p49
        %p122 = pneg %p46
        %p123 = pneg %p77
        %p124 = pneg %p74
        %s125 = sand.u32 %s64, 1
        %s126 = scalar_lea.sflag [#allocation5], %s125
        %s127 = sand.u32 %s64, 1
        %s128 = smul.addr %s127, 16
        %s129 = scalar_lea.vmem [#allocation6], %s128
        %s130 = smul.u32 %s20, %s21
        %p131 = scmp.eq.s32.totalorder %s20, 0
        %p132 = scmp.eq.s32.totalorder %s21, 0
        %p133 = pnand %p131, %p132
        %p134 = pneg %p133
        // Predicated region
        $region29: #{tpu_custom_call.1} parent=23 // pred_check
          _
        $region30: #{tpu_custom_call.1} parent=23 // pred_check_branch
          %136 = sbr.rel (%p133) target = $region32
        $region31: #{tpu_custom_call.1} parent=23 // pred_region
          %vm137 = vcmask 0
          %138 = vst.msk [vmem:[#allocation2] sm:$0x1] %vm137, inf
        $region32: #{tpu_custom_call.1} parent=23 // pred_fallthru
          _
        // Predicated region
        $region33: #{tpu_custom_call.1} parent=23 // pred_check
          %p139 = pneg %p131
        $region34: #{tpu_custom_call.1} parent=23 // pred_check_branch
          %141 = sbr.rel (%p139) target = $region36
        $region35: #{tpu_custom_call.1} parent=23 // pred_region
          %v142 = vld [vmem:[#allocation3] sm:$0xff]
          %v143 = vld [vmem:[#allocation3 + $0x8] sm:$0xff]
          %v144 = vlaneseq
          %v145 = vshrl.u32 %v144, 7
          %s146 = smul.u32 %s21, 2
          %v147 = vstv %s146
          %v148 = vadd.s32 %v147, %v145
          %vm149 = vcmp.lt.s32.totalorder %v148, 2
          %vm150 = vcmp.gt.f32.partialorder %v142, 0.0
          %vm151 = vcmp.gt.f32.partialorder %v143, 0.0
          %v152 = vsel %vm149, 1, 0
          %v154 = vunpack.c.l.s4 269488144
          %v155 = vunpack.c.0.s8 %v154
          %v156 = vlaneseq
          %v157 = vshrl.u32 %v156, 7
          %v158 = vsub.s32 %v155, %v157
          %v159 = vrot.slane %v152, %v158
          %vm160 = vcmp.ne.s32.totalorder %v159, 0
          %vm161 = vmand %vm150, %vm160
          %vm162 = vmand %vm151, %vm160
          %v163 = vsel %vm161, %v142, inf
          %v164 = vsel %vm162, %v143, inf
          %v167 = vcombine.high %v163, %v163
          %v169 = vunpack.c.l.s4 1983009808
          %v170 = vunpack.c.0.s8 %v169
          %v171 = vlaneseq
          %v172 = vshrl.u32 %v171, 7
          %v173 = vsub.s32 %v170, %v172
          %v174 = vrot.slane %v163, %v173
          %v176 = vunpack.c.l.s4 1983009808
          %v177 = vunpack.c.0.s8 %v176
          %v178 = vlaneseq
          %v179 = vshrl.u32 %v178, 7
          %v180 = vsub.s32 %v177, %v179
          %v181 = vrot.slane %v167, %v180
          %v182 = vcombine.high %v174, %v174
          %v183 = vcombine.high %v181, %v181
          %v184 = vcombine.high %v164, %v164
          %v186 = vunpack.c.l.s4 1983009808
          %v187 = vunpack.c.0.s8 %v186
          %v188 = vlaneseq
          %v189 = vshrl.u32 %v188, 7
          %v190 = vsub.s32 %v187, %v189
          %v191 = vrot.slane %v164, %v190
          %v193 = vunpack.c.l.s4 1983009808
          %v194 = vunpack.c.0.s8 %v193
          %v195 = vlaneseq
          %v196 = vshrl.u32 %v195, 7
          %v197 = vsub.s32 %v194, %v196
          %v198 = vrot.slane %v184, %v197
          %v199 = vcombine.high %v191, %v191
          %v200 = vcombine.high %v198, %v198
          %vm209 = vcmask 1041408
          %v210 = vsel %vm209, %v174, inf
          %v211 = vrot.slane %v210, 4
          %v212 = vmin.f32 %v210, %v211
          %v213 = vrot.slane %v212, 2
          %v214 = vmin.f32 %v212, %v213
          %v215 = vrot.slane %v214, 1
          %v216 = vmin.f32 %v214, %v215
          %v217 = vsel %vm209, %v182, inf
          %v218 = vrot.slane %v217, 4
          %v219 = vmin.f32 %v217, %v218
          %v220 = vrot.slane %v219, 2
          %v221 = vmin.f32 %v219, %v220
          %v222 = vrot.slane %v221, 1
          %v223 = vmin.f32 %v221, %v222
          %v224 = vsel %vm209, %v181, inf
          %v225 = vrot.slane %v224, 4
          %v226 = vmin.f32 %v224, %v225
          %v227 = vrot.slane %v226, 2
          %v228 = vmin.f32 %v226, %v227
          %v229 = vrot.slane %v228, 1
          %v230 = vmin.f32 %v228, %v229
          %v231 = vsel %vm209, %v183, inf
          %v232 = vrot.slane %v231, 4
          %v233 = vmin.f32 %v231, %v232
          %v234 = vrot.slane %v233, 2
          %v235 = vmin.f32 %v233, %v234
          %v236 = vrot.slane %v235, 1
          %v237 = vmin.f32 %v235, %v236
          %v238 = vsel %vm209, %v191, inf
          %v239 = vrot.slane %v238, 4
          %v240 = vmin.f32 %v238, %v239
          %v241 = vrot.slane %v240, 2
          %v242 = vmin.f32 %v240, %v241
          %v243 = vrot.slane %v242, 1
          %v244 = vmin.f32 %v242, %v243
          %v245 = vsel %vm209, %v199, inf
          %v246 = vrot.slane %v245, 4
          %v247 = vmin.f32 %v245, %v246
          %v248 = vrot.slane %v247, 2
          %v249 = vmin.f32 %v247, %v248
          %v250 = vrot.slane %v249, 1
          %v251 = vmin.f32 %v249, %v250
          %v252 = vsel %vm209, %v198, inf
          %v253 = vrot.slane %v252, 4
          %v254 = vmin.f32 %v252, %v253
          %v255 = vrot.slane %v254, 2
          %v256 = vmin.f32 %v254, %v255
          %v257 = vrot.slane %v256, 1
          %v258 = vmin.f32 %v256, %v257
          %v259 = vsel %vm209, %v200, inf
          %v260 = vrot.slane %v259, 4
          %v261 = vmin.f32 %v259, %v260
          %v262 = vrot.slane %v261, 2
          %v263 = vmin.f32 %v261, %v262
          %v264 = vrot.slane %v263, 1
          %v265 = vmin.f32 %v263, %v264
          %v266 = vmin.f32 %v216, %v244
          %v267 = vmin.f32 %v223, %v251
          %v268 = vmin.f32 %v230, %v258
          %v269 = vmin.f32 %v237, %v265
          %v270 = vmin.f32 %v266, %v267
          %v271 = vmin.f32 %v268, %v269
          %v272 = vmin.f32 %v270, %v271
          %273 = vmin.xlane.f32.xlu0 %v272
          %v274 = vpop.xlane.xlu0 %273
          %v275 = vld [vmem:[#allocation2] sm:$0x1]
          %v276 = vmin.f32 %v275, %v274
          %vm277 = vcmask 0
          %278 = vst.msk [vmem:[#allocation2] sm:$0x1] %vm277, %v276
        $region36: #{tpu_custom_call.1} parent=23 // pred_fallthru
          _
        %p279 = scmp.eq.s32.totalorder %s20, 1
        // Predicated region
        $region37: #{tpu_custom_call.1} parent=23 // pred_check
          %p280 = pneg %p279
        $region38: #{tpu_custom_call.1} parent=23 // pred_check_branch
          %282 = sbr.rel (%p280) target = $region40
        $region39: #{tpu_custom_call.1} parent=23 // pred_region
          %v283 = vld [vmem:[#allocation3] sm:$0xff]
          %v284 = vld [vmem:[#allocation3 + $0x8] sm:$0xff]
          %v285 = vld [vmem:[#allocation2] sm:$0x1]
          %v286 = vrcp.pop %v285
          %v287 = vmul.f32 1.0, %v286
          %v288 = vmax.f32 %v283, 0.0
          %v289 = vmax.f32 %v284, 0.0
          %v291 = vlaneseq
          %v292 = vshrl.u32 %v291, 7
          %v293 = vsub.s32 0, %v292
          %v294 = vrot.slane %v285, %v293
          %295 = vset.pattern.permute.xlu0 0
          %296 = vperm.xlu0 %295, %v294
          %v297 = vpop.permute.xlu0 %296
          %v299 = vmin.f32 %v288, %v297
          %v300 = vmin.f32 %v289, %v297
          %v302 = vlaneseq
          %v303 = vshrl.u32 %v302, 7
          %v304 = vsub.s32 0, %v303
          %v305 = vrot.slane %v287, %v304
          %306 = vset.pattern.permute.xlu0 0
          %307 = vperm.xlu0 %306, %v305
          %v308 = vpop.permute.xlu0 %307
          %v310 = vmul.f32 %v299, %v308
          %v311 = vmul.f32 %v300, %v308
          %312 = vst [vmem:[%s129] sm:$0xff] %v310
          %313 = vst [vmem:[%s129 + $0x8] sm:$0xff] %v311
        $region40: #{tpu_custom_call.1} parent=23 // pred_fallthru
          _
        %s314 = sand.u32 %s64, 1
        %s315 = scalar_lea.sflag [#allocation5], %s314
        %s316 = sand.u32 %s64, 1
        %s317 = smul.addr %s316, 16
        %s318 = scalar_lea.vmem [#allocation6], %s317
        // Predicated region
        $region41: #{tpu_custom_call.1} parent=23 // pred_check
          %p319 = pneg %p74
        $region42: #{tpu_custom_call.1} parent=23 // pred_check_branch
          %321 = sbr.rel (%p319) target = $region44
        $region43: #{tpu_custom_call.1} parent=23 // pred_region
          %s322 = smul.u32 %s20, %s21
          %s324 = ssub.s32 256, 256
          %325 = vsyncadd %s315, %s324
          %s326 = smul.addr %s322, 8
          %s327 = smul.addr %s326, 32
          %s328 = scalar_lea.hbm %s1, %s327
          %s330 = sshll.u32 %s318, 4
          %s331 = int_to_ptr.vmem [resolvable:$true] %s330
          %333 = dma.vmem_to_hbm [thread:$0]  %s331, 256, %s328, %s315
        $region44: #{tpu_custom_call.1} parent=23 // pred_fallthru
          _
      $region24: #{tpu_custom_call.1} parent=5 // pred_fallthru
        _
      %p334 = scmp.le.s32.totalorder 2, %s11
      // Predicated region
      $region45: #{tpu_custom_call.1} parent=5 // pred_check
        %p335 = pneg %p334
      $region46: #{tpu_custom_call.1} parent=5 // pred_check_branch
        %337 = sbr.rel (%p335) target = $region48
      $region47: #{tpu_custom_call.1} parent=5 // pred_region
        %s338 = ssub.s32 %s11, 2
        // Predicated region
        $region49: #{tpu_custom_call.1} parent=47 // pred_check
          %p339 = pneg %p80
        $region50: #{tpu_custom_call.1} parent=47 // pred_check_branch
          %341 = sbr.rel (%p339) target = $region52
        $region51: #{tpu_custom_call.1} parent=47 // pred_region
          %s342 = sand.u32 %s65, 1
          %s343 = scalar_lea.sflag [#allocation5], %s342
          %s344 = sand.u32 %s65, 1
          %s345 = smul.addr %s344, 16
          %s346 = scalar_lea.vmem [#allocation6], %s345
          %347 = dma.done %s343, 256
        $region52: #{tpu_custom_call.1} parent=47 // pred_fallthru
          _
      $region48: #{tpu_custom_call.1} parent=5 // pred_fallthru
        _
    $region6: #{tpu_custom_call.1} parent=1 // loop_footer
      %s15 = sadd.s32 1, %s11
    $region7: #{tpu_custom_call.1} parent=1 // loop_footer_branch
      %10 = sbr.rel target = $region3
    $region8: #{tpu_custom_call.1} parent=1 // loop_exit
      _
    %348 = vsyncpa [#allocation4], 1
    %s349 = scalar_lea.sflag [#allocation4], 1
    %350 = vsyncpa %s349, 1
    %351 = vsyncpa [#allocation5], 1
    %s352 = scalar_lea.sflag [#allocation5], 1
    %353 = vsyncpa %s352, 1

</llo_original>
